<compile_context>
chip_gen: v7x
topology: tpu7x:2x2x1
jax: 0.10.0
libtpu: 0.0.40
codegen_flags: <defaults>
</compile_context>

<pallas_src>
import jax
import jax.numpy as jnp
from jax.experimental import pallas as pl
from jax.experimental.pallas import tpu as pltpu

PAD = 128  # lane width; all feature dims are padded to this


def _round_up(x, m):
    return (x + m - 1) // m * m


def q_network_kernel(x_ref, w_ref, b_ref, o_ref):
    # x_ref: (TB, 128) bf16   w_ref: (3, 128, 128) bf16   b_ref: (8, 128) f32
    x = x_ref[...]
    b = b_ref[...]

    # fc1 + ReLU
    h = jnp.dot(x, w_ref[0], preferred_element_type=jnp.float32) + b[0:1, :]
    h = jnp.maximum(h, 0.0).astype(jnp.bfloat16)

    # fc2 + ReLU
    h = jnp.dot(h, w_ref[1], preferred_element_type=jnp.float32) + b[1:2, :]
    h = jnp.maximum(h, 0.0).astype(jnp.bfloat16)

    # fc3 (no activation)
    out = jnp.dot(h, w_ref[2], preferred_element_type=jnp.float32) + b[2:3, :]
    o_ref[...] = out.astype(o_ref.dtype)


def pack_params(params):
    """Pack (in,out)-layout weights/biases into one padded bf16 weight slab + one f32 bias slab."""
    w1, b1, w2, b2, w3, b3 = (
        params["w1"], params["b1"], params["w2"],
        params["b2"], params["w3"], params["b3"],
    )
    in_dim, hidden = w1.shape
    out_dim = w3.shape[1]
    assert max(in_dim, hidden, out_dim) <= PAD, "feature dims must fit in one 128-lane tile"

    wp = jnp.zeros((3, PAD, PAD), jnp.float32)
    wp = wp.at[0, :in_dim, :hidden].set(w1)
    wp = wp.at[1, :hidden, :hidden].set(w2)
    wp = wp.at[2, :hidden, :out_dim].set(w3)

    bp = jnp.zeros((8, PAD), jnp.float32)  # rows 0..2 = b1,b2,b3; rest zero (sublane pad)
    bp = bp.at[0, :hidden].set(b1.reshape(-1))
    bp = bp.at[1, :hidden].set(b2.reshape(-1))
    bp = bp.at[2, :out_dim].set(b3.reshape(-1))

    return wp.astype(jnp.bfloat16), bp


def q_network_forward(x, w_packed, b_packed, out_dim):
    """x: (B, in_dim) f32 -> (B, out_dim) f32."""
    B, in_dim = x.shape

    # batch tile: 8..512 rows, padded so the grid divides evenly
    TB = min(512, _round_up(B, 8))
    B_pad = _round_up(B, TB)

    # zero-pad batch and feature dims; cast activations to bf16 for the MXU
    xp = jnp.zeros((B_pad, PAD), jnp.bfloat16)
    xp = xp.at[:B, :in_dim].set(x.astype(jnp.bfloat16))

    out = pl.pallas_call(
        q_network_kernel,
        out_shape=jax.ShapeDtypeStruct((B_pad, PAD), jnp.float32),
        grid=(B_pad // TB,),
        in_specs=[
            pl.BlockSpec((TB, PAD), lambda i: (i, 0)),        # activations: blocked over batch
            pl.BlockSpec((3, PAD, PAD), lambda i: (0, 0, 0)),  # packed weights: VMEM-resident
            pl.BlockSpec((8, PAD), lambda i: (0, 0)),          # packed biases: VMEM-resident
        ],
        out_specs=pl.BlockSpec((TB, PAD), lambda i: (i, 0)),
        compiler_params=pltpu.CompilerParams(
            dimension_semantics=("parallel",),  # shards batch across TCs on v7x; no-op on v5e/v6e
        ),
    )(xp, w_packed, b_packed)

    return out[:B, :out_dim]


def init_params(key, input_dim=4, hidden=64, output=2):
    """Deterministic init mimicking nn.Linear's uniform(-1/sqrt(fan_in), 1/sqrt(fan_in))."""
    ks = jax.random.split(key, 6)

    def lin(kw, kb, fan_in, fan_out):
        bound = 1.0 / jnp.sqrt(float(fan_in))
        # stored as (in, out) so kernel computes x @ W, matching F.linear(x, W_pt, b) = x @ W_pt.T + b
        w = jax.random.uniform(kw, (fan_in, fan_out), jnp.float32, -bound, bound)
        b = jax.random.uniform(kb, (1, fan_out), jnp.float32, -bound, bound)
        return w, b

    w1, b1 = lin(ks[0], ks[1], input_dim, hidden)
    w2, b2 = lin(ks[2], ks[3], hidden, hidden)
    w3, b3 = lin(ks[4], ks[5], hidden, output)
    return {"w1": w1, "b1": b1, "w2": w2, "b2": b2, "w3": w3, "b3": b3}


def q_network_ref_f32(x, p):
    h1 = jnp.maximum(x @ p["w1"] + p["b1"], 0.0)
    h2 = jnp.maximum(h1 @ p["w2"] + p["b2"], 0.0)
    return h2 @ p["w3"] + p["b3"]


def q_network_ref_bf16(x, p):
    """Same math as the kernel: bf16 operands, f32 accumulation."""
    bf = jnp.bfloat16
    h = jnp.dot(x.astype(bf), p["w1"].astype(bf), preferred_element_type=jnp.float32) + p["b1"]
    h = jnp.maximum(h, 0.0)
    h = jnp.dot(h.astype(bf), p["w2"].astype(bf), preferred_element_type=jnp.float32) + p["b2"]
    h = jnp.maximum(h, 0.0)
    return jnp.dot(h.astype(bf), p["w3"].astype(bf), preferred_element_type=jnp.float32) + p["b3"]


if __name__ == "__main__":
    key = jax.random.PRNGKey(0)
    k_params, k_x = jax.random.split(key)

    batch, input_dim, hidden, output = 8, 4, 64, 2
    params = init_params(k_params, input_dim, hidden, output)
    x = jax.random.normal(k_x, (batch, input_dim), jnp.float32)

    w_packed, b_packed = pack_params(params)
    out = q_network_forward(x, w_packed, b_packed, output)
    out = jax.block_until_ready(out)

    ref_bf = q_network_ref_bf16(x, params)
    ref_f32 = q_network_ref_f32(x, params)

    assert out.shape == (batch, output)
    assert jnp.allclose(out, ref_bf, atol=1e-2, rtol=1e-2), "mismatch vs bf16 reference"
    assert jnp.allclose(out, ref_f32, atol=5e-2, rtol=5e-2), "mismatch vs f32 reference"

    print("KERNEL_OK")
</pallas_src>

<mosaic_0001>
module attributes {stable_mosaic.version = 11 : i64} {
  func.func @q_network_kernel(%arg0: i32, %arg1: memref<8x128xbf16, #tpu.memory_space<vmem>>, %arg2: memref<3x128x128xbf16, #tpu.memory_space<vmem>>, %arg3: memref<8x128xf32, #tpu.memory_space<vmem>>, %arg4: memref<8x128xf32, #tpu.memory_space<vmem>>) attributes {dimension_semantics = [#tpu.dimension_semantics<parallel>], iteration_bounds = array<i64: 1>, scalar_prefetch = 0 : i64, scratch_operands = 0 : i64, tpu.core_type = #tpu.core_type<tc>, window_params = [{transform_indices = @transform_0, window_bounds = array<i64: 8, 128>}, {pipeline_mode = #tpu.pipeline_mode<synchronous>, transform_indices = @transform_1, window_bounds = array<i64: 3, 128, 128>}, {pipeline_mode = #tpu.pipeline_mode<synchronous>, transform_indices = @transform_2, window_bounds = array<i64: 8, 128>}, {transform_indices = @transform_3, window_bounds = array<i64: 8, 128>}]} {
    %c0 = arith.constant 0 : index
    %c0_0 = arith.constant 0 : index
    %0 = vector.load %arg1[%c0, %c0_0] : memref<8x128xbf16, #tpu.memory_space<vmem>>, vector<8x128xbf16>
    %c0_1 = arith.constant 0 : index
    %c0_2 = arith.constant 0 : index
    %1 = vector.load %arg3[%c0_1, %c0_2] : memref<8x128xf32, #tpu.memory_space<vmem>>, vector<8x128xf32>
    %c0_3 = arith.constant 0 : index
    %c0_4 = arith.constant 0 : index
    %c0_5 = arith.constant 0 : index
    %2 = vector.load %arg2[%c0_3, %c0_4, %c0_5] : memref<3x128x128xbf16, #tpu.memory_space<vmem>>, vector<1x128x128xbf16>
    %3 = vector.shape_cast %2 : vector<1x128x128xbf16> to vector<128x128xbf16>
    %cst = arith.constant dense<0.000000e+00> : vector<8x128xf32>
    %4 = tpu.matmul %0, %3, %cst {dimension_numbers = #tpu.dot_dimension_numbers<[1], [0], [0], [1], [0, 0, 1, 1], [], []>} : vector<8x128xbf16>, vector<128x128xbf16>, vector<8x128xf32> -> vector<8x128xf32>
    %5 = vector.extract_strided_slice %1 {offsets = [0, 0], sizes = [1, 128], strides = [1, 1]} : vector<8x128xf32> to vector<1x128xf32>
    %6 = vector.broadcast %5 : vector<1x128xf32> to vector<8x128xf32>
    %7 = arith.addf %4, %6 : vector<8x128xf32>
    %cst_6 = arith.constant 0.000000e+00 : f32
    %8 = vector.broadcast %cst_6 : f32 to vector<8x128xf32>
    %9 = arith.maximumf %7, %8 : vector<8x128xf32>
    %10 = arith.truncf %9 : vector<8x128xf32> to vector<8x128xbf16>
    %c1 = arith.constant 1 : index
    %c0_7 = arith.constant 0 : index
    %c0_8 = arith.constant 0 : index
    %11 = vector.load %arg2[%c1, %c0_7, %c0_8] : memref<3x128x128xbf16, #tpu.memory_space<vmem>>, vector<1x128x128xbf16>
    %12 = vector.shape_cast %11 : vector<1x128x128xbf16> to vector<128x128xbf16>
    %cst_9 = arith.constant dense<0.000000e+00> : vector<8x128xf32>
    %13 = tpu.matmul %10, %12, %cst_9 {dimension_numbers = #tpu.dot_dimension_numbers<[1], [0], [0], [1], [0, 0, 1, 1], [], []>} : vector<8x128xbf16>, vector<128x128xbf16>, vector<8x128xf32> -> vector<8x128xf32>
    %14 = vector.extract_strided_slice %1 {offsets = [1, 0], sizes = [1, 128], strides = [1, 1]} : vector<8x128xf32> to vector<1x128xf32>
    %15 = vector.broadcast %14 : vector<1x128xf32> to vector<8x128xf32>
    %16 = arith.addf %13, %15 : vector<8x128xf32>
    %cst_10 = arith.constant 0.000000e+00 : f32
    %17 = vector.broadcast %cst_10 : f32 to vector<8x128xf32>
    %18 = arith.maximumf %16, %17 : vector<8x128xf32>
    %19 = arith.truncf %18 : vector<8x128xf32> to vector<8x128xbf16>
    %c2 = arith.constant 2 : index
    %c0_11 = arith.constant 0 : index
    %c0_12 = arith.constant 0 : index
    %20 = vector.load %arg2[%c2, %c0_11, %c0_12] : memref<3x128x128xbf16, #tpu.memory_space<vmem>>, vector<1x128x128xbf16>
    %21 = vector.shape_cast %20 : vector<1x128x128xbf16> to vector<128x128xbf16>
    %cst_13 = arith.constant dense<0.000000e+00> : vector<8x128xf32>
    %22 = tpu.matmul %19, %21, %cst_13 {dimension_numbers = #tpu.dot_dimension_numbers<[1], [0], [0], [1], [0, 0, 1, 1], [], []>} : vector<8x128xbf16>, vector<128x128xbf16>, vector<8x128xf32> -> vector<8x128xf32>
    %23 = vector.extract_strided_slice %1 {offsets = [2, 0], sizes = [1, 128], strides = [1, 1]} : vector<8x128xf32> to vector<1x128xf32>
    %24 = vector.broadcast %23 : vector<1x128xf32> to vector<8x128xf32>
    %25 = arith.addf %22, %24 : vector<8x128xf32>
    %c0_14 = arith.constant 0 : index
    %c0_15 = arith.constant 0 : index
    %26 = vector.load %arg4[%c0_14, %c0_15] : memref<8x128xf32, #tpu.memory_space<vmem>>, vector<8x128xf32>
    tpu.vector_store %arg4[%c0_14, %c0_15], %25 {strides = array<i32>} : memref<8x128xf32, #tpu.memory_space<vmem>>, vector<8x128xf32>,
    return
  }
  func.func @transform_0(%arg0: i32) -> (i32, i32) {
    %c0_i32 = arith.constant 0 : i32
    %c0_i32_0 = arith.constant 0 : i32
    return %arg0, %c0_i32 : i32, i32
  }
  func.func @transform_1(%arg0: i32) -> (i32, i32, i32) {
    %c0_i32 = arith.constant 0 : i32
    %c0_i32_0 = arith.constant 0 : i32
    %c0_i32_1 = arith.constant 0 : i32
    %c0_i32_2 = arith.constant 0 : i32
    return %c0_i32, %c0_i32_0, %c0_i32_1 : i32, i32, i32
  }
  func.func @transform_2(%arg0: i32) -> (i32, i32) {
    %c0_i32 = arith.constant 0 : i32
    %c0_i32_0 = arith.constant 0 : i32
    %c0_i32_1 = arith.constant 0 : i32
    return %c0_i32, %c0_i32_0 : i32, i32
  }
  func.func @transform_3(%arg0: i32) -> (i32, i32) {
    %c0_i32 = arith.constant 0 : i32
    %c0_i32_0 = arith.constant 0 : i32
    return %arg0, %c0_i32 : i32, i32
  }
}

</mosaic_0001>

<llo_original>
// kernel: tpu_custom_call.1
$region0: #{tpu_custom_call.1}
  #allocation0 [shape = 'u32[]', space=smem, size = 0x4, offset = 0x4, fixed_abs, tag = 'smem constant byte address 0x4 - core index']
  #allocation1 [shape = 'u32[144,128]{1,0:T(1,128)}', space=vmem, size = 0x12000, scoped, tag = 'internal scratch']
  %s0 = inlined_call_operand.hbm [shape: bf16[8,128], index: 0, kind: input, shape index: {}]
  %s1 = inlined_call_operand.hbm [shape: bf16[3,128,128], index: 1, kind: input, shape index: {}]
  %s2 = inlined_call_operand.hbm [shape: f32[8,128], index: 2, kind: input, shape index: {}]
  %s3 = inlined_call_operand.hbm [shape: f32[8,128], index: 3, kind: output, shape index: {}]
  %s4 = sld [smem:[#allocation0]]
  $region34: #{tpu_custom_call.1} parent=0
    _
  %s6 = ssub.s32 1, %s4
  %s7 = scalar_select 0, %s6, %s4
  $region1: #{tpu_custom_call.1} parent=0
    #allocation2 [shape = 'u8[2048]{0}', space=vmem, size = 0x800, scoped, tag = 'input window, operand 0, single buffered']
    #allocation3 [shape = 's32[1]{0}', space=sflag, size = 0x4, scoped, tag = 'scoped memory for tpu_custom_call.1']
    #allocation4 [shape = 's32[1]{0}', space=sflag, size = 0x4, scoped, tag = 'scoped memory for tpu_custom_call.1']
    #allocation5 [shape = 'u8[98304]{0}', space=vmem, size = 0x18000, scoped, tag = 'input window, operand 1, single buffered']
    #allocation6 [shape = 's32[1]{0}', space=sflag, size = 0x4, scoped, tag = 'scoped memory for tpu_custom_call.1']
    #allocation7 [shape = 'u8[4096]{0}', space=vmem, size = 0x1000, scoped, tag = 'input window, operand 2, single buffered']
    #allocation8 [shape = 'u8[4096]{0}', space=vmem, size = 0x1000, scoped, tag = 'output window, operand 0, single buffered']
    %8 = vsyncpa [#allocation3], 0
    %9 = vsyncpa [#allocation6], 0
    %10 = vsyncpa [#allocation4], 0
    // Predicated region
    $region2: #{tpu_custom_call.1} parent=1 // pred_check
      _
    $region3: #{tpu_custom_call.1} parent=1 // pred_check_branch
      %12 = sbr.rel (0) target = $region5
    $region4: #{tpu_custom_call.1} parent=1 // pred_region
      %s14 = ssub.s32 64, 64
      %15 = vsyncadd [#allocation3], %s14
      %s17 = sshll.u32 [#allocation2], 4
      %s18 = int_to_ptr.vmem [resolvable:$true] %s17
      %20 = dma.hbm_to_vmem [thread:$0]  %s0, 64, %s18, [#allocation3]
    $region5: #{tpu_custom_call.1} parent=1 // pred_fallthru
      _
    // Predicated region
    $region6: #{tpu_custom_call.1} parent=1 // pred_check
      _
    $region7: #{tpu_custom_call.1} parent=1 // pred_check_branch
      %22 = sbr.rel (0) target = $region9
    $region8: #{tpu_custom_call.1} parent=1 // pred_region
      %s24 = ssub.s32 3072, 3072
      %25 = vsyncadd [#allocation6], %s24
      %s26 = sshll.u32 [#allocation5], 4
      %s27 = int_to_ptr.vmem [resolvable:$true] %s26
      %32 = dma.hbm_to_vmem [thread:$0]  %s1, 3072, %s27, [#allocation6], 64, 64, 4
    $region9: #{tpu_custom_call.1} parent=1 // pred_fallthru
      _
    // Predicated region
    $region10: #{tpu_custom_call.1} parent=1 // pred_check
      _
    $region11: #{tpu_custom_call.1} parent=1 // pred_check_branch
      %34 = sbr.rel (0) target = $region13
    $region12: #{tpu_custom_call.1} parent=1 // pred_region
      %s36 = ssub.s32 128, 128
      %37 = vsyncadd [#allocation6], %s36
      %s39 = sshll.u32 [#allocation7], 4
      %s40 = int_to_ptr.vmem [resolvable:$true] %s39
      %42 = dma.hbm_to_vmem [thread:$0]  %s2, 128, %s40, [#allocation6]
    $region13: #{tpu_custom_call.1} parent=1 // pred_fallthru
      _
    // Predicated region
    $region14: #{tpu_custom_call.1} parent=1 // pred_check
      _
    $region15: #{tpu_custom_call.1} parent=1 // pred_check_branch
      %44 = sbr.rel (0) target = $region17
    $region16: #{tpu_custom_call.1} parent=1 // pred_region
      %45 = dma.done [#allocation3], 64
    $region17: #{tpu_custom_call.1} parent=1 // pred_fallthru
      _
    // Predicated region
    $region18: #{tpu_custom_call.1} parent=1 // pred_check
      _
    $region19: #{tpu_custom_call.1} parent=1 // pred_check_branch
      %47 = sbr.rel (0) target = $region21
    $region20: #{tpu_custom_call.1} parent=1 // pred_region
      %48 = dma.done [#allocation6], 3072
    $region21: #{tpu_custom_call.1} parent=1 // pred_fallthru
      _
    // Predicated region
    $region22: #{tpu_custom_call.1} parent=1 // pred_check
      _
    $region23: #{tpu_custom_call.1} parent=1 // pred_check_branch
      %50 = sbr.rel (0) target = $region25
    $region24: #{tpu_custom_call.1} parent=1 // pred_region
      %51 = dma.done [#allocation6], 128
    $region25: #{tpu_custom_call.1} parent=1 // pred_fallthru
      _
    %v53 = vld [vmem:[#allocation2] sm:$0xf]
    %v54 = vld [vmem:[#allocation7] sm:$0xff]
    %v55 = vld [vmem:[#allocation5] sm:$0xf]
    %v56 = vld [vmem:[#allocation5 + $0x4] sm:$0xf]
    %v57 = vld [vmem:[#allocation5 + $0x8] sm:$0xf]
    %v58 = vld [vmem:[#allocation5 + $0xc] sm:$0xf]
    %v59 = vld [vmem:[#allocation5 + $0x10] sm:$0xf]
    %v60 = vld [vmem:[#allocation5 + $0x14] sm:$0xf]
    %v61 = vld [vmem:[#allocation5 + $0x18] sm:$0xf]
    %v62 = vld [vmem:[#allocation5 + $0x1c] sm:$0xf]
    %v63 = vld [vmem:[#allocation5 + $0x20] sm:$0xf]
    %v64 = vld [vmem:[#allocation5 + $0x24] sm:$0xf]
    %v65 = vld [vmem:[#allocation5 + $0x28] sm:$0xf]
    %v66 = vld [vmem:[#allocation5 + $0x2c] sm:$0xf]
    %v67 = vld [vmem:[#allocation5 + $0x30] sm:$0xf]
    %v68 = vld [vmem:[#allocation5 + $0x34] sm:$0xf]
    %v69 = vld [vmem:[#allocation5 + $0x38] sm:$0xf]
    %v70 = vld [vmem:[#allocation5 + $0x3c] sm:$0xf]
    %v71 = vlaneseq
    %v72 = vshrl.u32 %v71, 7
    %v73 = vsub.s32 0, %v72
    %v74 = vrot.slane %v54, %v73
    %v91 = vunpack.c.l.b16 %v55
    %v92 = vunpack.c.l.b16 %v56
    %v93 = vunpack.c.l.b16 %v57
    %v94 = vunpack.c.l.b16 %v58
    %v95 = vunpack.c.l.b16 %v59
    %v96 = vunpack.c.l.b16 %v60
    %v97 = vunpack.c.l.b16 %v61
    %v98 = vunpack.c.l.b16 %v62
    %v99 = vunpack.c.l.b16 %v63
    %v100 = vunpack.c.l.b16 %v64
    %v101 = vunpack.c.l.b16 %v65
    %v102 = vunpack.c.l.b16 %v66
    %v103 = vunpack.c.l.b16 %v67
    %v104 = vunpack.c.l.b16 %v68
    %v105 = vunpack.c.l.b16 %v69
    %v106 = vunpack.c.l.b16 %v70
    %v107 = vpack.c.b16 %v92, %v91
    %v108 = vpack.c.b16 %v94, %v93
    %v109 = vpack.c.b16 %v96, %v95
    %v110 = vpack.c.b16 %v98, %v97
    %v111 = vpack.c.b16 %v100, %v99
    %v112 = vpack.c.b16 %v102, %v101
    %v113 = vpack.c.b16 %v104, %v103
    %v114 = vpack.c.b16 %v106, %v105
    %123 = vmatprep.subr.bf16.mxu0 0
    %124 = vmatpush1.bf16.msra.mxu0 %v107
    %125 = vmatprep.subr.bf16.mxu0 0
    %126 = vmatpush1.bf16.msra.mxu0 %v108
    %127 = vmatprep.subr.bf16.mxu0 0
    %128 = vmatpush1.bf16.msra.mxu0 %v109
    %129 = vmatprep.subr.bf16.mxu0 0
    %130 = vmatpush1.bf16.msra.mxu0 %v110
    %131 = vmatprep.subr.bf16.mxu0 0
    %132 = vmatpush1.bf16.msra.mxu0 %v111
    %133 = vmatprep.subr.bf16.mxu0 0
    %134 = vmatpush1.bf16.msra.mxu0 %v112
    %135 = vmatprep.subr.bf16.mxu0 0
    %136 = vmatpush1.bf16.msra.mxu0 %v113
    %137 = vmatprep.subr.bf16.mxu0 0
    %138 = vmatpush1.bf16.msra.mxu0 %v114
    %139 = vmatprep.subr.bf16.mxu0 0
    %140 = vmatpush1.bf16.msra.mxu0 0
    %141 = vmatprep.subr.bf16.mxu0 0
    %142 = vmatpush1.bf16.msra.mxu0 0
    %143 = vmatprep.subr.bf16.mxu0 0
    %144 = vmatpush1.bf16.msra.mxu0 0
    %145 = vmatprep.subr.bf16.mxu0 0
    %146 = vmatpush1.bf16.msra.mxu0 0
    %147 = vmatprep.subr.bf16.mxu0 0
    %148 = vmatpush1.bf16.msra.mxu0 0
    %149 = vmatprep.subr.bf16.mxu0 0
    %150 = vmatpush1.bf16.msra.mxu0 0
    %151 = vmatprep.subr.bf16.mxu0 0
    %152 = vmatpush1.bf16.msra.mxu0 0
    %153 = vmatprep.subr.bf16.mxu0 0
    %154 = vmatpush1.bf16.msra.mxu0 0
    %155 = vmatprep.mubr.bf16.mxu0 0
    %156 = vmatmul.mubr.bf16.gmra.mrb[0].mxu0 %v53
    %v157 = vpop.f32.mrb[0].mxu0
    %v158 = vadd.f32 %v74, %v157
    %v159 = vpop.f32.mrb[0].mxu0
    %v160 = vpop.f32.mrb[0].mxu0
    %v161 = vpop.f32.mrb[0].mxu0
    %162 = vdwg.mxu0
    %v163 = vmax.f32 %v158, 0.0
    %v164 = vpack.c.bf16 %v163, %v163
    %s165 = scalar_lea.vmem [#allocation5], 64
    %v166 = vld [vmem:[%s165] sm:$0xf]
    %v167 = vld [vmem:[%s165 + $0x4] sm:$0xf]
    %v168 = vld [vmem:[%s165 + $0x8] sm:$0xf]
    %v169 = vld [vmem:[%s165 + $0xc] sm:$0xf]
    %v170 = vld [vmem:[%s165 + $0x10] sm:$0xf]
    %v171 = vld [vmem:[%s165 + $0x14] sm:$0xf]
    %v172 = vld [vmem:[%s165 + $0x18] sm:$0xf]
    %v173 = vld [vmem:[%s165 + $0x1c] sm:$0xf]
    %v174 = vld [vmem:[%s165 + $0x20] sm:$0xf]
    %v175 = vld [vmem:[%s165 + $0x24] sm:$0xf]
    %v176 = vld [vmem:[%s165 + $0x28] sm:$0xf]
    %v177 = vld [vmem:[%s165 + $0x2c] sm:$0xf]
    %v178 = vld [vmem:[%s165 + $0x30] sm:$0xf]
    %v179 = vld [vmem:[%s165 + $0x34] sm:$0xf]
    %v180 = vld [vmem:[%s165 + $0x38] sm:$0xf]
    %v181 = vld [vmem:[%s165 + $0x3c] sm:$0xf]
    %v182 = vlaneseq
    %v183 = vshrl.u32 %v182, 7
    %v184 = vsub.s32 1, %v183
    %v185 = vrot.slane %v54, %v184
    %v202 = vunpack.c.l.b16 %v166
    %v203 = vunpack.c.l.b16 %v167
    %v204 = vunpack.c.l.b16 %v168
    %v205 = vunpack.c.l.b16 %v169
    %v206 = vunpack.c.l.b16 %v170
    %v207 = vunpack.c.l.b16 %v171
    %v208 = vunpack.c.l.b16 %v172
    %v209 = vunpack.c.l.b16 %v173
    %v210 = vunpack.c.l.b16 %v174
    %v211 = vunpack.c.l.b16 %v175
    %v212 = vunpack.c.l.b16 %v176
    %v213 = vunpack.c.l.b16 %v177
    %v214 = vunpack.c.l.b16 %v178
    %v215 = vunpack.c.l.b16 %v179
    %v216 = vunpack.c.l.b16 %v180
    %v217 = vunpack.c.l.b16 %v181
    %v218 = vpack.c.b16 %v203, %v202
    %v219 = vpack.c.b16 %v205, %v204
    %v220 = vpack.c.b16 %v207, %v206
    %v221 = vpack.c.b16 %v209, %v208
    %v222 = vpack.c.b16 %v211, %v210
    %v223 = vpack.c.b16 %v213, %v212
    %v224 = vpack.c.b16 %v215, %v214
    %v225 = vpack.c.b16 %v217, %v216
    %234 = vmatprep.subr.bf16.mxu0 0
    %235 = vmatpush1.bf16.msra.mxu0 %v218
    %236 = vmatprep.subr.bf16.mxu0 0
    %237 = vmatpush1.bf16.msra.mxu0 %v219
    %238 = vmatprep.subr.bf16.mxu0 0
    %239 = vmatpush1.bf16.msra.mxu0 %v220
    %240 = vmatprep.subr.bf16.mxu0 0
    %241 = vmatpush1.bf16.msra.mxu0 %v221
    %242 = vmatprep.subr.bf16.mxu0 0
    %243 = vmatpush1.bf16.msra.mxu0 %v222
    %244 = vmatprep.subr.bf16.mxu0 0
    %245 = vmatpush1.bf16.msra.mxu0 %v223
    %246 = vmatprep.subr.bf16.mxu0 0
    %247 = vmatpush1.bf16.msra.mxu0 %v224
    %248 = vmatprep.subr.bf16.mxu0 0
    %249 = vmatpush1.bf16.msra.mxu0 %v225
    %250 = vmatprep.subr.bf16.mxu0 0
    %251 = vmatpush1.bf16.msra.mxu0 0
    %252 = vmatprep.subr.bf16.mxu0 0
    %253 = vmatpush1.bf16.msra.mxu0 0
    %254 = vmatprep.subr.bf16.mxu0 0
    %255 = vmatpush1.bf16.msra.mxu0 0
    %256 = vmatprep.subr.bf16.mxu0 0
    %257 = vmatpush1.bf16.msra.mxu0 0
    %258 = vmatprep.subr.bf16.mxu0 0
    %259 = vmatpush1.bf16.msra.mxu0 0
    %260 = vmatprep.subr.bf16.mxu0 0
    %261 = vmatpush1.bf16.msra.mxu0 0
    %262 = vmatprep.subr.bf16.mxu0 0
    %263 = vmatpush1.bf16.msra.mxu0 0
    %264 = vmatprep.subr.bf16.mxu0 0
    %265 = vmatpush1.bf16.msra.mxu0 0
    %266 = vmatprep.mubr.bf16.mxu0 0
    %267 = vmatmul.mubr.bf16.gmra.mrb[0].mxu0 %v164
    %v268 = vpop.f32.mrb[0].mxu0
    %v269 = vadd.f32 %v185, %v268
    %v270 = vpop.f32.mrb[0].mxu0
    %v271 = vpop.f32.mrb[0].mxu0
    %v272 = vpop.f32.mrb[0].mxu0
    %273 = vdwg.mxu0
    %v274 = vmax.f32 %v269, 0.0
    %v275 = vpack.c.bf16 %v274, %v274
    %s276 = scalar_lea.vmem [#allocation5], 128
    %v277 = vld [vmem:[%s276] sm:$0xf]
    %v278 = vld [vmem:[%s276 + $0x4] sm:$0xf]
    %v279 = vld [vmem:[%s276 + $0x8] sm:$0xf]
    %v280 = vld [vmem:[%s276 + $0xc] sm:$0xf]
    %v281 = vld [vmem:[%s276 + $0x10] sm:$0xf]
    %v282 = vld [vmem:[%s276 + $0x14] sm:$0xf]
    %v283 = vld [vmem:[%s276 + $0x18] sm:$0xf]
    %v284 = vld [vmem:[%s276 + $0x1c] sm:$0xf]
    %v285 = vld [vmem:[%s276 + $0x20] sm:$0xf]
    %v286 = vld [vmem:[%s276 + $0x24] sm:$0xf]
    %v287 = vld [vmem:[%s276 + $0x28] sm:$0xf]
    %v288 = vld [vmem:[%s276 + $0x2c] sm:$0xf]
    %v289 = vld [vmem:[%s276 + $0x30] sm:$0xf]
    %v290 = vld [vmem:[%s276 + $0x34] sm:$0xf]
    %v291 = vld [vmem:[%s276 + $0x38] sm:$0xf]
    %v292 = vld [vmem:[%s276 + $0x3c] sm:$0xf]
    %v293 = vlaneseq
    %v294 = vshrl.u32 %v293, 7
    %v295 = vsub.s32 2, %v294
    %v296 = vrot.slane %v54, %v295
    %v313 = vunpack.c.l.b16 %v277
    %v314 = vunpack.c.l.b16 %v278
    %v315 = vunpack.c.l.b16 %v279
    %v316 = vunpack.c.l.b16 %v280
    %v317 = vunpack.c.l.b16 %v281
    %v318 = vunpack.c.l.b16 %v282
    %v319 = vunpack.c.l.b16 %v283
    %v320 = vunpack.c.l.b16 %v284
    %v321 = vunpack.c.l.b16 %v285
    %v322 = vunpack.c.l.b16 %v286
    %v323 = vunpack.c.l.b16 %v287
    %v324 = vunpack.c.l.b16 %v288
    %v325 = vunpack.c.l.b16 %v289
    %v326 = vunpack.c.l.b16 %v290
    %v327 = vunpack.c.l.b16 %v291
    %v328 = vunpack.c.l.b16 %v292
    %v329 = vpack.c.b16 %v314, %v313
    %v330 = vpack.c.b16 %v316, %v315
    %v331 = vpack.c.b16 %v318, %v317
    %v332 = vpack.c.b16 %v320, %v319
    %v333 = vpack.c.b16 %v322, %v321
    %v334 = vpack.c.b16 %v324, %v323
    %v335 = vpack.c.b16 %v326, %v325
    %v336 = vpack.c.b16 %v328, %v327
    %345 = vmatprep.subr.bf16.mxu0 0
    %346 = vmatpush1.bf16.msra.mxu0 %v329
    %347 = vmatprep.subr.bf16.mxu0 0
    %348 = vmatpush1.bf16.msra.mxu0 %v330
    %349 = vmatprep.subr.bf16.mxu0 0
    %350 = vmatpush1.bf16.msra.mxu0 %v331
    %351 = vmatprep.subr.bf16.mxu0 0
    %352 = vmatpush1.bf16.msra.mxu0 %v332
    %353 = vmatprep.subr.bf16.mxu0 0
    %354 = vmatpush1.bf16.msra.mxu0 %v333
    %355 = vmatprep.subr.bf16.mxu0 0
    %356 = vmatpush1.bf16.msra.mxu0 %v334
    %357 = vmatprep.subr.bf16.mxu0 0
    %358 = vmatpush1.bf16.msra.mxu0 %v335
    %359 = vmatprep.subr.bf16.mxu0 0
    %360 = vmatpush1.bf16.msra.mxu0 %v336
    %361 = vmatprep.subr.bf16.mxu0 0
    %362 = vmatpush1.bf16.msra.mxu0 0
    %363 = vmatprep.subr.bf16.mxu0 0
    %364 = vmatpush1.bf16.msra.mxu0 0
    %365 = vmatprep.subr.bf16.mxu0 0
    %366 = vmatpush1.bf16.msra.mxu0 0
    %367 = vmatprep.subr.bf16.mxu0 0
    %368 = vmatpush1.bf16.msra.mxu0 0
    %369 = vmatprep.subr.bf16.mxu0 0
    %370 = vmatpush1.bf16.msra.mxu0 0
    %371 = vmatprep.subr.bf16.mxu0 0
    %372 = vmatpush1.bf16.msra.mxu0 0
    %373 = vmatprep.subr.bf16.mxu0 0
    %374 = vmatpush1.bf16.msra.mxu0 0
    %375 = vmatprep.subr.bf16.mxu0 0
    %376 = vmatpush1.bf16.msra.mxu0 0
    %377 = vmatprep.mubr.bf16.mxu0 0
    %378 = vmatmul.mubr.bf16.gmra.mrb[0].mxu0 %v275
    %v379 = vpop.f32.mrb[0].mxu0
    %v380 = vadd.f32 %v296, %v379
    %v381 = vpop.f32.mrb[0].mxu0
    %v382 = vpop.f32.mrb[0].mxu0
    %v383 = vpop.f32.mrb[0].mxu0
    %384 = vdwg.mxu0
    %385 = vst [vmem:[#allocation8] sm:$0xff] %v380
    // Predicated region
    $region26: #{tpu_custom_call.1} parent=1 // pred_check
      _
    $region27: #{tpu_custom_call.1} parent=1 // pred_check_branch
      %387 = sbr.rel (0) target = $region29
    $region28: #{tpu_custom_call.1} parent=1 // pred_region
      %s389 = ssub.s32 128, 128
      %390 = vsyncadd [#allocation4], %s389
      %s392 = sshll.u32 [#allocation8], 4
      %s393 = int_to_ptr.vmem [resolvable:$true] %s392
      %395 = dma.vmem_to_hbm [thread:$0]  %s393, 128, %s3, [#allocation4]
    $region29: #{tpu_custom_call.1} parent=1 // pred_fallthru
      _
    // Predicated region
    $region30: #{tpu_custom_call.1} parent=1 // pred_check
      _
    $region31: #{tpu_custom_call.1} parent=1 // pred_check_branch
      %397 = sbr.rel (0) target = $region33
    $region32: #{tpu_custom_call.1} parent=1 // pred_region
      %398 = dma.done [#allocation4], 128
    $region33: #{tpu_custom_call.1} parent=1 // pred_fallthru
      _
    %399 = vsyncpa [#allocation3], 1
    %400 = vsyncpa [#allocation6], 1
    %401 = vsyncpa [#allocation4], 1

</llo_original>
